<compile_context>
chip_gen: v7x
topology: tpu7x:2x2x1
jax: 0.10.0
libtpu: 0.0.40
codegen_flags: <defaults>
</compile_context>

<pallas_src>
import jax
import jax.numpy as jnp
from jax import lax
from jax.experimental import pallas as pl
from jax.experimental.pallas import tpu as pltpu

_LANES = 128
_TARGET_BLOCK_BYTES = 2 * 1024 * 1024   # combined x+t bytes DMA'd per grid step


def _round_up(x, m):
    return ((x + m - 1) // m) * m


def _bce_with_logits(x, t):
    # Numerically stable BCE-with-logits: max(x,0) - x*t + log(1 + exp(-|x|)).
    # (log(1+z) instead of log1p keeps the in-kernel op set to exp/log only; the
    #  difference is <~1e-7 per element, irrelevant for a mean loss.)
    return jnp.maximum(x, 0.0) - x * t + jnp.log(1.0 + jnp.exp(-jnp.abs(x)))


def _cores_per_chip():
    # 2 TensorCores per chip on megacore parts (v4 / v5p / v7x); 1 on v5e / v6e.
    try:
        kind = jax.devices()[0].device_kind.lower()
    except Exception:
        return 1
    return 2 if any(tag in kind for tag in ("v4", "v5p", "v7", "tpu7")) else 1


def _bce_sum_pallas(xm, tm, rows, br, n_cores):
    """Sum of per-element BCE-with-logits losses over a (rows, 128) slab."""
    nblocks = pl.cdiv(rows, br)
    P = max(1, min(n_cores, nblocks))
    steps = pl.cdiv(nblocks, P)
    fold = 32 if br % 32 == 0 else (16 if br % 16 == 0 else 8)
    last_rows = rows - (nblocks - 1) * br          # valid rows in the final block
    has_partial_last = (rows % br) != 0
    has_dup_steps = (P * steps) != nblocks         # rectangular grid over-covers

    if has_dup_steps:
        # Clamp so no DMA is issued for a fully out-of-bounds block; the duplicated
        # grid steps simply skip accumulation inside the kernel.
        in_map = lambda p, s: (jnp.minimum(s * P + p, nblocks - 1), 0)
    else:
        in_map = lambda p, s: (s * P + p, 0)

    def kernel(x_ref, t_ref, o_ref):
        p = pl.program_id(0)
        s = pl.program_id(1)
        blk = s * P + p                            # linear block id (pre-clamp)

        @pl.when(s == 0)
        def _init():
            o_ref[...] = jnp.zeros_like(o_ref)

        xv = x_ref[...].astype(jnp.float32)
        tv = t_ref[...].astype(jnp.float32)
        loss = _bce_with_logits(xv, tv)

        def fold_sum(v):
            # (br,128) -> (fold,128): `fold/8` independent vreg accumulation chains.
            return v.reshape(br // fold, fold, _LANES).sum(axis=0)

        if has_partial_last:
            @pl.when(blk < nblocks - 1)
            def _full():
                o_ref[...] += fold_sum(loss)

            @pl.when(blk == nblocks - 1)
            def _last():      # only the final block pays the row mask
                row = lax.broadcasted_iota(jnp.int32, (br, _LANES), 0)
                o_ref[...] += fold_sum(jnp.where(row < last_rows, loss, 0.0))
        elif has_dup_steps:
            @pl.when(blk < nblocks)
            def _full():
                o_ref[...] += fold_sum(loss)
        else:
            o_ref[...] += fold_sum(loss)

    out = pl.pallas_call(
        kernel,
        out_shape=jax.ShapeDtypeStruct((P * fold, _LANES), jnp.float32),
        grid=(P, steps),
        in_specs=[
            pl.BlockSpec((br, _LANES), in_map),
            pl.BlockSpec((br, _LANES), in_map),
        ],
        out_specs=pl.BlockSpec((fold, _LANES), lambda p, s: (p, 0)),
        compiler_params=pltpu.CompilerParams(
            dimension_semantics=("parallel" if P > 1 else "arbitrary", "arbitrary"),
        ),
    )(xm, tm)
    # Final tiny cross-lane reduce on the (P*fold, 128) partials.
    return jnp.sum(out)


def bce_log_loss(output, target):
    """Equivalent of BCELogLoss().forward(output, target) -> scalar mean loss."""
    # torch .squeeze(1): drop the channel dim when it is 1.
    x = jnp.squeeze(output, axis=1) if (output.ndim > 1 and output.shape[1] == 1) else output
    t = target
    n = int(x.size)

    xf = x.reshape(-1)
    tf = t.reshape(-1)

    # Minimal sublane multiple for packed dtypes (8 for 32-bit, 16 for bf16, 32 for i8).
    sub = 8
    for a in (xf, tf):
        sub = max(sub, 32 // max(1, a.dtype.itemsize))

    n_cores = _cores_per_chip()

    rows = n // _LANES
    if rows < sub:            # too small for even one minimal tile -> all in plain JAX
        rows = 0
    n_main = rows * _LANES

    # Ragged remainder (< max(128, sub*128) elements): tiny, summed in plain JAX.
    if n_main < n:
        xt = xf[n_main:].astype(jnp.float32)
        tt = tf[n_main:].astype(jnp.float32)
        tail_sum = jnp.sum(_bce_with_logits(xt, tt))
    else:
        tail_sum = jnp.zeros((), jnp.float32)

    if rows == 0:
        return tail_sum / n

    # Block rows: ~_TARGET_BLOCK_BYTES of combined input DMA per grid step, rounded to
    # the packed-dtype sublane multiple, never larger than the slab itself.
    bytes_per_row = _LANES * (xf.dtype.itemsize + tf.dtype.itemsize)
    cap = max(sub, (_TARGET_BLOCK_BYTES // bytes_per_row) // sub * sub)
    br = min(cap, _round_up(pl.cdiv(rows, n_cores), sub))
    if br > rows:
        br = (rows // sub) * sub

    xm = (xf if n_main == n else xf[:n_main]).reshape(rows, _LANES)
    tm = (tf if n_main == n else tf[:n_main]).reshape(rows, _LANES)

    main_sum = _bce_sum_pallas(xm, tm, rows, br, n_cores)
    return (main_sum + tail_sum) / n


if __name__ == "__main__":
    key = jax.random.PRNGKey(0)
    k1, k2, k3, k4 = jax.random.split(key, 4)

    loss_fn = jax.jit(bce_log_loss)

    # output: (N, 1, H, W) logits ; target: (N, H, W) binary labels.
    N, H, W = 2, 32, 33                      # n = 2112: kernel slab + ragged JAX tail
    logits = jax.random.normal(k1, (N, 1, H, W), dtype=jnp.float32) * 2.0
    target = (jax.random.uniform(k2, (N, H, W)) > 0.5).astype(jnp.float32)

    loss = loss_fn(logits, target)
    jax.block_until_ready(loss)

    ref = jnp.mean(_bce_with_logits(logits[:, 0], target))
    assert jnp.allclose(loss, ref, atol=1e-5, rtol=1e-4), (loss, ref)

    # Second, slightly larger odd shape: forces multiple blocks so the masked
    # last-block path is exercised too.
    N2, H2, W2 = 2, 511, 263
    logits2 = jax.random.normal(k3, (N2, 1, H2, W2), dtype=jnp.float32) * 3.0
    target2 = (jax.random.uniform(k4, (N2, H2, W2)) > 0.5).astype(jnp.float32)
    loss2 = loss_fn(logits2, target2)
    jax.block_until_ready(loss2)

    ref2 = jnp.mean(_bce_with_logits(logits2[:, 0], target2))
    assert jnp.allclose(loss2, ref2, atol=1e-5, rtol=1e-4), (loss2, ref2)

    print("KERNEL_OK")
</pallas_src>

<mosaic_0001>
module attributes {stable_mosaic.version = 11 : i64} {
  func.func @kernel(%arg0: i32, %arg1: i32, %arg2: memref<16x128xf32, #tpu.memory_space<vmem>>, %arg3: memref<16x128xf32, #tpu.memory_space<vmem>>, %arg4: memref<16x128xf32, #tpu.memory_space<vmem>>) attributes {dimension_semantics = [#tpu.dimension_semantics<arbitrary>, #tpu.dimension_semantics<arbitrary>], iteration_bounds = array<i64: 1, 1>, scalar_prefetch = 0 : i64, scratch_operands = 0 : i64, tpu.core_type = #tpu.core_type<tc>, window_params = [{transform_indices = @transform_0, window_bounds = array<i64: 16, 128>}, {transform_indices = @transform_1, window_bounds = array<i64: 16, 128>}, {transform_indices = @transform_2, window_bounds = array<i64: 16, 128>}]} {
    %c0_i32 = arith.constant 0 : i32
    %0 = arith.cmpi eq, %arg1, %c0_i32 : i32
    %1 = arith.extui %0 : i1 to i32
    %c0_i32_0 = arith.constant 0 : i32
    %2 = arith.cmpi ne, %1, %c0_i32_0 : i32
    scf.if %2 {
      %cst_11 = arith.constant 0.000000e+00 : f32
      %22 = vector.broadcast %cst_11 : f32 to vector<16x128xf32>
      %c0_12 = arith.constant 0 : index
      %c0_13 = arith.constant 0 : index
      %23 = vector.load %arg4[%c0_12, %c0_13] : memref<16x128xf32, #tpu.memory_space<vmem>>, vector<16x128xf32>
      tpu.vector_store %arg4[%c0_12, %c0_13], %22 {strides = array<i32>} : memref<16x128xf32, #tpu.memory_space<vmem>>, vector<16x128xf32>,
    } else {
    }
    %c0 = arith.constant 0 : index
    %c0_1 = arith.constant 0 : index
    %3 = vector.load %arg2[%c0, %c0_1] : memref<16x128xf32, #tpu.memory_space<vmem>>, vector<16x128xf32>
    %c0_2 = arith.constant 0 : index
    %c0_3 = arith.constant 0 : index
    %4 = vector.load %arg3[%c0_2, %c0_3] : memref<16x128xf32, #tpu.memory_space<vmem>>, vector<16x128xf32>
    %cst = arith.constant 0.000000e+00 : f32
    %5 = vector.broadcast %cst : f32 to vector<16x128xf32>
    %6 = arith.maximumf %3, %5 : vector<16x128xf32>
    %7 = arith.mulf %3, %4 : vector<16x128xf32>
    %8 = arith.subf %6, %7 : vector<16x128xf32>
    %9 = math.absf %3 : vector<16x128xf32>
    %cst_4 = arith.constant 0.000000e+00 : f32
    %10 = vector.broadcast %cst_4 : f32 to vector<16x128xf32>
    %11 = arith.subf %10, %9 : vector<16x128xf32>
    %12 = math.exp %11 : vector<16x128xf32>
    %cst_5 = arith.constant 1.000000e+00 : f32
    %13 = vector.broadcast %cst_5 : f32 to vector<16x128xf32>
    %14 = arith.addf %13, %12 : vector<16x128xf32>
    %15 = math.log %14 : vector<16x128xf32>
    %16 = arith.addf %8, %15 : vector<16x128xf32>
    %c0_6 = arith.constant 0 : index
    %c0_7 = arith.constant 0 : index
    %17 = vector.load %arg4[%c0_6, %c0_7] : memref<16x128xf32, #tpu.memory_space<vmem>>, vector<16x128xf32>
    %18 = vector.shape_cast %16 : vector<16x128xf32> to vector<1x16x128xf32>
    %cst_8 = arith.constant dense<0.000000e+00> : vector<16x128xf32>
    %19 = vector.multi_reduction <add>, %18, %cst_8 [0] : vector<1x16x128xf32> to vector<16x128xf32>
    %20 = arith.addf %17, %19 : vector<16x128xf32>
    %c0_9 = arith.constant 0 : index
    %c0_10 = arith.constant 0 : index
    %21 = vector.load %arg4[%c0_9, %c0_10] : memref<16x128xf32, #tpu.memory_space<vmem>>, vector<16x128xf32>
    tpu.vector_store %arg4[%c0_9, %c0_10], %20 {strides = array<i32>} : memref<16x128xf32, #tpu.memory_space<vmem>>, vector<16x128xf32>,
    return
  }
  func.func @transform_0(%arg0: i32, %arg1: i32) -> (i32, i32) {
    %c1_i32 = arith.constant 1 : i32
    %0 = arith.muli %arg1, %c1_i32 : i32
    %1 = arith.addi %0, %arg0 : i32
    %c0_i32 = arith.constant 0 : i32
    %c0_i32_0 = arith.constant 0 : i32
    return %1, %c0_i32 : i32, i32
  }
  func.func @transform_1(%arg0: i32, %arg1: i32) -> (i32, i32) {
    %c1_i32 = arith.constant 1 : i32
    %0 = arith.muli %arg1, %c1_i32 : i32
    %1 = arith.addi %0, %arg0 : i32
    %c0_i32 = arith.constant 0 : i32
    %c0_i32_0 = arith.constant 0 : i32
    return %1, %c0_i32 : i32, i32
  }
  func.func @transform_2(%arg0: i32, %arg1: i32) -> (i32, i32) {
    %c0_i32 = arith.constant 0 : i32
    %c0_i32_0 = arith.constant 0 : i32
    return %arg0, %c0_i32 : i32, i32
  }
}

</mosaic_0001>

<llo_original>
// kernel: squeeze.1
$region0: #{squeeze.1}
  %s0 = inlined_call_operand.hbm [shape: f32[2,1,32,33], index: 0, kind: input, shape index: {}]
  %s1 = inlined_call_operand.vmem [shape: f32[2112], index: 1, kind: output, shape index: {}]
  $region1: #{squeeze.1} parent=0
    #allocation0 [shape = 'u8[32768]{0}', space=vmem, size = 0x8000, scoped, tag = 'operand span for operand 0']
    #allocation1 [shape = 's32[1]{0}', space=sflag, size = 0x4, scoped, tag = 'scoped memory for squeeze.1']
    %2 = vsyncpa [#allocation1], 0
    %s4 = ssub.s32 1024, 1024
    %5 = vsyncadd [#allocation1], %s4
    %s7 = sshll.u32 [#allocation0], 4
    %s8 = int_to_ptr.vmem [resolvable:$true] %s7
    %10 = dma.hbm_to_vmem [thread:$0]  %s0, 1024, %s8, [#allocation1]
    %11 = dma.done [#allocation1], 1024
    %v12 = vld [vmem:[#allocation0] sm:$0x1]
    %vm13 = vcmask 269312
    %14 = vst.msk [vmem:[%s1] sm:$0x1] %vm13, %v12
    %s15 = scalar_lea.vmem [#allocation0], 31
    %v16 = vld [vmem:[%s15] sm:$0x1]
    %s17 = scalar_lea.vmem [#allocation0], 31
    %v18 = vld [vmem:[%s17] sm:$0x1]
    %vm19 = vcmask 7168
    %v20 = vsel %vm19, %v18, %v16
    %21 = vrot.lane.b32.xlu0 %v20, 127
    %v22 = vpop.permute.xlu0 %21
    %vm23 = vcmask 261120
    %s24 = scalar_lea.vmem %s1, 8
    %25 = vst.msk [vmem:[%s24] sm:$0x1] %vm23, %v22
    %vm26 = vcmask 1048568
    %s27 = scalar_lea.vmem %s1, 7
    %28 = vst.msk [vmem:[%s27] sm:$0x1] %vm26, %v22
    %s29 = scalar_lea.vmem [#allocation0], 62
    %v30 = vld [vmem:[%s29] sm:$0x1]
    %s31 = scalar_lea.vmem [#allocation0], 62
    %v32 = vld [vmem:[%s31] sm:$0x1]
    %vm33 = vcmask 15360
    %v34 = vsel %vm33, %v32, %v30
    %35 = vrot.lane.b32.xlu0 %v34, 126
    %v36 = vpop.permute.xlu0 %35
    %vm37 = vcmask 252928
    %s38 = scalar_lea.vmem %s1, 16
    %39 = vst.msk [vmem:[%s38] sm:$0x1] %vm37, %v36
    %vm40 = vcmask 1048560
    %s41 = scalar_lea.vmem %s1, 15
    %42 = vst.msk [vmem:[%s41] sm:$0x1] %vm40, %v36
    %s43 = scalar_lea.vmem [#allocation0], 27
    %v44 = vld [vmem:[%s43] sm:$0x1]
    %s45 = scalar_lea.vmem [#allocation0], 27
    %v46 = vld [vmem:[%s45] sm:$0x1]
    %vm47 = vcmask 39936
    %v48 = vsel %vm47, %v46, %v44
    %49 = vrot.lane.b32.xlu0 %v48, 123
    %v50 = vpop.permute.xlu0 %49
    %vm51 = vcmask 228352
    %s52 = scalar_lea.vmem %s1, 7
    %53 = vst.msk [vmem:[%s52] sm:$0x1] %vm51, %v50
    %vm54 = vcmask 1048536
    %s55 = scalar_lea.vmem %s1, 6
    %56 = vst.msk [vmem:[%s55] sm:$0x1] %vm54, %v50
    %s57 = scalar_lea.vmem [#allocation0], 58
    %v58 = vld [vmem:[%s57] sm:$0x1]
    %s59 = scalar_lea.vmem [#allocation0], 58
    %v60 = vld [vmem:[%s59] sm:$0x1]
    %vm61 = vcmask 48128
    %v62 = vsel %vm61, %v60, %v58
    %63 = vrot.lane.b32.xlu0 %v62, 122
    %v64 = vpop.permute.xlu0 %63
    %vm65 = vcmask 220160
    %s66 = scalar_lea.vmem %s1, 15
    %67 = vst.msk [vmem:[%s66] sm:$0x1] %vm65, %v64
    %vm68 = vcmask 1048528
    %s69 = scalar_lea.vmem %s1, 14
    %70 = vst.msk [vmem:[%s69] sm:$0x1] %vm68, %v64
    %s71 = scalar_lea.vmem [#allocation0], 23
    %v72 = vld [vmem:[%s71] sm:$0x1]
    %s73 = scalar_lea.vmem [#allocation0], 23
    %v74 = vld [vmem:[%s73] sm:$0x1]
    %vm75 = vcmask 72704
    %v76 = vsel %vm75, %v74, %v72
    %77 = vrot.lane.b32.xlu0 %v76, 119
    %v78 = vpop.permute.xlu0 %77
    %vm79 = vcmask 195584
    %s80 = scalar_lea.vmem %s1, 6
    %81 = vst.msk [vmem:[%s80] sm:$0x1] %vm79, %v78
    %vm82 = vcmask 1048504
    %s83 = scalar_lea.vmem %s1, 5
    %84 = vst.msk [vmem:[%s83] sm:$0x1] %vm82, %v78
    %s85 = scalar_lea.vmem [#allocation0], 54
    %v86 = vld [vmem:[%s85] sm:$0x1]
    %s87 = scalar_lea.vmem [#allocation0], 54
    %v88 = vld [vmem:[%s87] sm:$0x1]
    %vm89 = vcmask 80896
    %v90 = vsel %vm89, %v88, %v86
    %91 = vrot.lane.b32.xlu0 %v90, 118
    %v92 = vpop.permute.xlu0 %91
    %vm93 = vcmask 187392
    %s94 = scalar_lea.vmem %s1, 14
    %95 = vst.msk [vmem:[%s94] sm:$0x1] %vm93, %v92
    %vm96 = vcmask 1048496
    %s97 = scalar_lea.vmem %s1, 13
    %98 = vst.msk [vmem:[%s97] sm:$0x1] %vm96, %v92
    %s99 = scalar_lea.vmem [#allocation0], 19
    %v100 = vld [vmem:[%s99] sm:$0x1]
    %s101 = scalar_lea.vmem [#allocation0], 19
    %v102 = vld [vmem:[%s101] sm:$0x1]
    %vm103 = vcmask 105472
    %v104 = vsel %vm103, %v102, %v100
    %105 = vrot.lane.b32.xlu0 %v104, 115
    %v106 = vpop.permute.xlu0 %105
    %vm107 = vcmask 162816
    %s108 = scalar_lea.vmem %s1, 5
    %109 = vst.msk [vmem:[%s108] sm:$0x1] %vm107, %v106
    %vm110 = vcmask 1048472
    %s111 = scalar_lea.vmem %s1, 4
    %112 = vst.msk [vmem:[%s111] sm:$0x1] %vm110, %v106
    %s113 = scalar_lea.vmem [#allocation0], 50
    %v114 = vld [vmem:[%s113] sm:$0x1]
    %s115 = scalar_lea.vmem [#allocation0], 50
    %v116 = vld [vmem:[%s115] sm:$0x1]
    %vm117 = vcmask 113664
    %v118 = vsel %vm117, %v116, %v114
    %119 = vrot.lane.b32.xlu0 %v118, 114
    %v120 = vpop.permute.xlu0 %119
    %vm121 = vcmask 154624
    %s122 = scalar_lea.vmem %s1, 13
    %123 = vst.msk [vmem:[%s122] sm:$0x1] %vm121, %v120
    %vm124 = vcmask 1048464
    %s125 = scalar_lea.vmem %s1, 12
    %126 = vst.msk [vmem:[%s125] sm:$0x1] %vm124, %v120
    %s127 = scalar_lea.vmem [#allocation0], 15
    %v128 = vld [vmem:[%s127] sm:$0x1]
    %s129 = scalar_lea.vmem [#allocation0], 15
    %v130 = vld [vmem:[%s129] sm:$0x1]
    %vm131 = vcmask 138240
    %v132 = vsel %vm131, %v130, %v128
    %133 = vrot.lane.b32.xlu0 %v132, 111
    %v134 = vpop.permute.xlu0 %133
    %vm135 = vcmask 130048
    %s136 = scalar_lea.vmem %s1, 4
    %137 = vst.msk [vmem:[%s136] sm:$0x1] %vm135, %v134
    %vm138 = vcmask 1048440
    %s139 = scalar_lea.vmem %s1, 3
    %140 = vst.msk [vmem:[%s139] sm:$0x1] %vm138, %v134
    %s141 = scalar_lea.vmem [#allocation0], 46
    %v142 = vld [vmem:[%s141] sm:$0x1]
    %s143 = scalar_lea.vmem [#allocation0], 46
    %v144 = vld [vmem:[%s143] sm:$0x1]
    %vm145 = vcmask 146432
    %v146 = vsel %vm145, %v144, %v142
    %147 = vrot.lane.b32.xlu0 %v146, 110
    %v148 = vpop.permute.xlu0 %147
    %vm149 = vcmask 121856
    %s150 = scalar_lea.vmem %s1, 12
    %151 = vst.msk [vmem:[%s150] sm:$0x1] %vm149, %v148
    %vm152 = vcmask 1048432
    %s153 = scalar_lea.vmem %s1, 11
    %154 = vst.msk [vmem:[%s153] sm:$0x1] %vm152, %v148
    %s155 = scalar_lea.vmem [#allocation0], 11
    %v156 = vld [vmem:[%s155] sm:$0x1]
    %s157 = scalar_lea.vmem [#allocation0], 11
    %v158 = vld [vmem:[%s157] sm:$0x1]
    %vm159 = vcmask 171008
    %v160 = vsel %vm159, %v158, %v156
    %161 = vrot.lane.b32.xlu0 %v160, 107
    %v162 = vpop.permute.xlu0 %161
    %vm163 = vcmask 97280
    %s164 = scalar_lea.vmem %s1, 3
    %165 = vst.msk [vmem:[%s164] sm:$0x1] %vm163, %v162
    %vm166 = vcmask 1048408
    %s167 = scalar_lea.vmem %s1, 2
    %168 = vst.msk [vmem:[%s167] sm:$0x1] %vm166, %v162
    %s169 = scalar_lea.vmem [#allocation0], 42
    %v170 = vld [vmem:[%s169] sm:$0x1]
    %s171 = scalar_lea.vmem [#allocation0], 42
    %v172 = vld [vmem:[%s171] sm:$0x1]
    %vm173 = vcmask 179200
    %v174 = vsel %vm173, %v172, %v170
    %175 = vrot.lane.b32.xlu0 %v174, 106
    %v176 = vpop.permute.xlu0 %175
    %vm177 = vcmask 89088
    %s178 = scalar_lea.vmem %s1, 11
    %179 = vst.msk [vmem:[%s178] sm:$0x1] %vm177, %v176
    %vm180 = vcmask 1048400
    %s181 = scalar_lea.vmem %s1, 10
    %182 = vst.msk [vmem:[%s181] sm:$0x1] %vm180, %v176
    %s183 = scalar_lea.vmem [#allocation0], 7
    %v184 = vld [vmem:[%s183] sm:$0x1]
    %s185 = scalar_lea.vmem [#allocation0], 7
    %v186 = vld [vmem:[%s185] sm:$0x1]
    %vm187 = vcmask 203776
    %v188 = vsel %vm187, %v186, %v184
    %189 = vrot.lane.b32.xlu0 %v188, 103
    %v190 = vpop.permute.xlu0 %189
    %vm191 = vcmask 64512
    %s192 = scalar_lea.vmem %s1, 2
    %193 = vst.msk [vmem:[%s192] sm:$0x1] %vm191, %v190
    %vm194 = vcmask 1048376
    %s195 = scalar_lea.vmem %s1, 1
    %196 = vst.msk [vmem:[%s195] sm:$0x1] %vm194, %v190
    %s197 = scalar_lea.vmem [#allocation0], 38
    %v198 = vld [vmem:[%s197] sm:$0x1]
    %s199 = scalar_lea.vmem [#allocation0], 38
    %v200 = vld [vmem:[%s199] sm:$0x1]
    %vm201 = vcmask 211968
    %v202 = vsel %vm201, %v200, %v198
    %203 = vrot.lane.b32.xlu0 %v202, 102
    %v204 = vpop.permute.xlu0 %203
    %vm205 = vcmask 56320
    %s206 = scalar_lea.vmem %s1, 10
    %207 = vst.msk [vmem:[%s206] sm:$0x1] %vm205, %v204
    %vm208 = vcmask 1048368
    %s209 = scalar_lea.vmem %s1, 9
    %210 = vst.msk [vmem:[%s209] sm:$0x1] %vm208, %v204
    %s211 = scalar_lea.vmem [#allocation0], 3
    %v212 = vld [vmem:[%s211] sm:$0x1]
    %s213 = scalar_lea.vmem [#allocation0], 3
    %v214 = vld [vmem:[%s213] sm:$0x1]
    %vm215 = vcmask 236544
    %v216 = vsel %vm215, %v214, %v212
    %217 = vrot.lane.b32.xlu0 %v216, 99
    %v218 = vpop.permute.xlu0 %217
    %vm219 = vcmask 31744
    %s220 = scalar_lea.vmem %s1, 1
    %221 = vst.msk [vmem:[%s220] sm:$0x1] %vm219, %v218
    %vm222 = vcmask 1048344
    %223 = vst.msk [vmem:[%s1] sm:$0x1] %vm222, %v218
    %s224 = scalar_lea.vmem [#allocation0], 34
    %v225 = vld [vmem:[%s224] sm:$0x1]
    %s226 = scalar_lea.vmem [#allocation0], 34
    %v227 = vld [vmem:[%s226] sm:$0x1]
    %vm228 = vcmask 244736
    %v229 = vsel %vm228, %v227, %v225
    %230 = vrot.lane.b32.xlu0 %v229, 98
    %v231 = vpop.permute.xlu0 %230
    %vm232 = vcmask 23552
    %s233 = scalar_lea.vmem %s1, 9
    %234 = vst.msk [vmem:[%s233] sm:$0x1] %vm232, %v231
    %vm235 = vcmask 1048336
    %s236 = scalar_lea.vmem %s1, 8
    %237 = vst.msk [vmem:[%s236] sm:$0x1] %vm235, %v231
    %s238 = scalar_lea.vmem [#allocation0], 30
    %v239 = vld [vmem:[%s238] sm:$0x1]
    %240 = vrot.lane.b32.xlu0 %v239, 94
    %v241 = vpop.permute.xlu0 %240
    %vm242 = vcmask 1040112
    %s243 = scalar_lea.vmem %s1, 7
    %244 = vst.msk [vmem:[%s243] sm:$0x1] %vm242, %v241
    %s245 = scalar_lea.vmem [#allocation0], 61
    %v246 = vld [vmem:[%s245] sm:$0x1]
    %247 = vrot.lane.b32.xlu0 %v246, 93
    %v248 = vpop.permute.xlu0 %247
    %vm249 = vcmask 1031912
    %s250 = scalar_lea.vmem %s1, 15
    %251 = vst.msk [vmem:[%s250] sm:$0x1] %vm249, %v248
    %s252 = scalar_lea.vmem [#allocation0], 26
    %v253 = vld [vmem:[%s252] sm:$0x1]
    %254 = vrot.lane.b32.xlu0 %v253, 90
    %v255 = vpop.permute.xlu0 %254
    %vm256 = vcmask 1007312
    %s257 = scalar_lea.vmem %s1, 6
    %258 = vst.msk [vmem:[%s257] sm:$0x1] %vm256, %v255
    %s259 = scalar_lea.vmem [#allocation0], 57
    %v260 = vld [vmem:[%s259] sm:$0x1]
    %261 = vrot.lane.b32.xlu0 %v260, 89
    %v262 = vpop.permute.xlu0 %261
    %vm263 = vcmask 999112
    %s264 = scalar_lea.vmem %s1, 14
    %265 = vst.msk [vmem:[%s264] sm:$0x1] %vm263, %v262
    %s266 = scalar_lea.vmem [#allocation0], 22
    %v267 = vld [vmem:[%s266] sm:$0x1]
    %268 = vrot.lane.b32.xlu0 %v267, 86
    %v269 = vpop.permute.xlu0 %268
    %vm270 = vcmask 974512
    %s271 = scalar_lea.vmem %s1, 5
    %272 = vst.msk [vmem:[%s271] sm:$0x1] %vm270, %v269
    %s273 = scalar_lea.vmem [#allocation0], 53
    %v274 = vld [vmem:[%s273] sm:$0x1]
    %275 = vrot.lane.b32.xlu0 %v274, 85
    %v276 = vpop.permute.xlu0 %275
    %vm277 = vcmask 966312
    %s278 = scalar_lea.vmem %s1, 13
    %279 = vst.msk [vmem:[%s278] sm:$0x1] %vm277, %v276
    %s280 = scalar_lea.vmem [#allocation0], 18
    %v281 = vld [vmem:[%s280] sm:$0x1]
    %282 = vrot.lane.b32.xlu0 %v281, 82
    %v283 = vpop.permute.xlu0 %282
    %vm284 = vcmask 941712
    %s285 = scalar_lea.vmem %s1, 4
    %286 = vst.msk [vmem:[%s285] sm:$0x1] %vm284, %v283
    %s287 = scalar_lea.vmem [#allocation0], 49
    %v288 = vld [vmem:[%s287] sm:$0x1]
    %289 = vrot.lane.b32.xlu0 %v288, 81
    %v290 = vpop.permute.xlu0 %289
    %vm291 = vcmask 933512
    %s292 = scalar_lea.vmem %s1, 12
    %293 = vst.msk [vmem:[%s292] sm:$0x1] %vm291, %v290
    %s294 = scalar_lea.vmem [#allocation0], 14
    %v295 = vld [vmem:[%s294] sm:$0x1]
    %296 = vrot.lane.b32.xlu0 %v295, 78
    %v297 = vpop.permute.xlu0 %296
    %vm298 = vcmask 908912
    %s299 = scalar_lea.vmem %s1, 3
    %300 = vst.msk [vmem:[%s299] sm:$0x1] %vm298, %v297
    %s301 = scalar_lea.vmem [#allocation0], 45
    %v302 = vld [vmem:[%s301] sm:$0x1]
    %303 = vrot.lane.b32.xlu0 %v302, 77
    %v304 = vpop.permute.xlu0 %303
    %vm305 = vcmask 900712
    %s306 = scalar_lea.vmem %s1, 11
    %307 = vst.msk [vmem:[%s306] sm:$0x1] %vm305, %v304
    %s308 = scalar_lea.vmem [#allocation0], 10
    %v309 = vld [vmem:[%s308] sm:$0x1]
    %310 = vrot.lane.b32.xlu0 %v309, 74
    %v311 = vpop.permute.xlu0 %310
    %vm312 = vcmask 876112
    %s313 = scalar_lea.vmem %s1, 2
    %314 = vst.msk [vmem:[%s313] sm:$0x1] %vm312, %v311
    %s315 = scalar_lea.vmem [#allocation0], 41
    %v316 = vld [vmem:[%s315] sm:$0x1]
    %317 = vrot.lane.b32.xlu0 %v316, 73
    %v318 = vpop.permute.xlu0 %317
    %vm319 = vcmask 867912
    %s320 = scalar_lea.vmem %s1, 10
    %321 = vst.msk [vmem:[%s320] sm:$0x1] %vm319, %v318
    %s322 = scalar_lea.vmem [#allocation0], 6
    %v323 = vld [vmem:[%s322] sm:$0x1]
    %324 = vrot.lane.b32.xlu0 %v323, 70
    %v325 = vpop.permute.xlu0 %324
    %vm326 = vcmask 843312
    %s327 = scalar_lea.vmem %s1, 1
    %328 = vst.msk [vmem:[%s327] sm:$0x1] %vm326, %v325
    %s329 = scalar_lea.vmem [#allocation0], 37
    %v330 = vld [vmem:[%s329] sm:$0x1]
    %331 = vrot.lane.b32.xlu0 %v330, 69
    %v332 = vpop.permute.xlu0 %331
    %vm333 = vcmask 835112
    %s334 = scalar_lea.vmem %s1, 9
    %335 = vst.msk [vmem:[%s334] sm:$0x1] %vm333, %v332
    %s336 = scalar_lea.vmem [#allocation0], 2
    %v337 = vld [vmem:[%s336] sm:$0x1]
    %338 = vrot.lane.b32.xlu0 %v337, 66
    %v339 = vpop.permute.xlu0 %338
    %vm340 = vcmask 810512
    %341 = vst.msk [vmem:[%s1] sm:$0x1] %vm340, %v339
    %s342 = scalar_lea.vmem [#allocation0], 33
    %v343 = vld [vmem:[%s342] sm:$0x1]
    %344 = vrot.lane.b32.xlu0 %v343, 65
    %v345 = vpop.permute.xlu0 %344
    %vm346 = vcmask 802312
    %s347 = scalar_lea.vmem %s1, 8
    %348 = vst.msk [vmem:[%s347] sm:$0x1] %vm346, %v345
    %s349 = scalar_lea.vmem [#allocation0], 29
    %v350 = vld [vmem:[%s349] sm:$0x1]
    %351 = vrot.lane.b32.xlu0 %v350, 61
    %v352 = vpop.permute.xlu0 %351
    %vm353 = vcmask 769512
    %s354 = scalar_lea.vmem %s1, 7
    %355 = vst.msk [vmem:[%s354] sm:$0x1] %vm353, %v352
    %s356 = scalar_lea.vmem [#allocation0], 60
    %v357 = vld [vmem:[%s356] sm:$0x1]
    %358 = vrot.lane.b32.xlu0 %v357, 60
    %v359 = vpop.permute.xlu0 %358
    %vm360 = vcmask 761312
    %s361 = scalar_lea.vmem %s1, 15
    %362 = vst.msk [vmem:[%s361] sm:$0x1] %vm360, %v359
    %s363 = scalar_lea.vmem [#allocation0], 25
    %v364 = vld [vmem:[%s363] sm:$0x1]
    %365 = vrot.lane.b32.xlu0 %v364, 57
    %v366 = vpop.permute.xlu0 %365
    %vm367 = vcmask 736712
    %s368 = scalar_lea.vmem %s1, 6
    %369 = vst.msk [vmem:[%s368] sm:$0x1] %vm367, %v366
    %s370 = scalar_lea.vmem [#allocation0], 56
    %v371 = vld [vmem:[%s370] sm:$0x1]
    %372 = vrot.lane.b32.xlu0 %v371, 56
    %v373 = vpop.permute.xlu0 %372
    %vm374 = vcmask 728512
    %s375 = scalar_lea.vmem %s1, 14
    %376 = vst.msk [vmem:[%s375] sm:$0x1] %vm374, %v373
    %s377 = scalar_lea.vmem [#allocation0], 21
    %v378 = vld [vmem:[%s377] sm:$0x1]
    %379 = vrot.lane.b32.xlu0 %v378, 53
    %v380 = vpop.permute.xlu0 %379
    %vm381 = vcmask 703912
    %s382 = scalar_lea.vmem %s1, 5
    %383 = vst.msk [vmem:[%s382] sm:$0x1] %vm381, %v380
    %s384 = scalar_lea.vmem [#allocation0], 52
    %v385 = vld [vmem:[%s384] sm:$0x1]
    %386 = vrot.lane.b32.xlu0 %v385, 52
    %v387 = vpop.permute.xlu0 %386
    %vm388 = vcmask 695712
    %s389 = scalar_lea.vmem %s1, 13
    %390 = vst.msk [vmem:[%s389] sm:$0x1] %vm388, %v387
    %s391 = scalar_lea.vmem [#allocation0], 17
    %v392 = vld [vmem:[%s391] sm:$0x1]
    %393 = vrot.lane.b32.xlu0 %v392, 49
    %v394 = vpop.permute.xlu0 %393
    %vm395 = vcmask 671112
    %s396 = scalar_lea.vmem %s1, 4
    %397 = vst.msk [vmem:[%s396] sm:$0x1] %vm395, %v394
    %s398 = scalar_lea.vmem [#allocation0], 48
    %v399 = vld [vmem:[%s398] sm:$0x1]
    %400 = vrot.lane.b32.xlu0 %v399, 48
    %v401 = vpop.permute.xlu0 %400
    %vm402 = vcmask 662912
    %s403 = scalar_lea.vmem %s1, 12
    %404 = vst.msk [vmem:[%s403] sm:$0x1] %vm402, %v401
    %s405 = scalar_lea.vmem [#allocation0], 13
    %v406 = vld [vmem:[%s405] sm:$0x1]
    %407 = vrot.lane.b32.xlu0 %v406, 45
    %v408 = vpop.permute.xlu0 %407
    %vm409 = vcmask 638312
    %s410 = scalar_lea.vmem %s1, 3
    %411 = vst.msk [vmem:[%s410] sm:$0x1] %vm409, %v408
    %s412 = scalar_lea.vmem [#allocation0], 44
    %v413 = vld [vmem:[%s412] sm:$0x1]
    %414 = vrot.lane.b32.xlu0 %v413, 44
    %v415 = vpop.permute.xlu0 %414
    %vm416 = vcmask 630112
    %s417 = scalar_lea.vmem %s1, 11
    %418 = vst.msk [vmem:[%s417] sm:$0x1] %vm416, %v415
    %s419 = scalar_lea.vmem [#allocation0], 9
    %v420 = vld [vmem:[%s419] sm:$0x1]
    %421 = vrot.lane.b32.xlu0 %v420, 41
    %v422 = vpop.permute.xlu0 %421
    %vm423 = vcmask 605512
    %s424 = scalar_lea.vmem %s1, 2
    %425 = vst.msk [vmem:[%s424] sm:$0x1] %vm423, %v422
    %s426 = scalar_lea.vmem [#allocation0], 40
    %v427 = vld [vmem:[%s426] sm:$0x1]
    %428 = vrot.lane.b32.xlu0 %v427, 40
    %v429 = vpop.permute.xlu0 %428
    %vm430 = vcmask 597312
    %s431 = scalar_lea.vmem %s1, 10
    %432 = vst.msk [vmem:[%s431] sm:$0x1] %vm430, %v429
    %s433 = scalar_lea.vmem [#allocation0], 5
    %v434 = vld [vmem:[%s433] sm:$0x1]
    %435 = vrot.lane.b32.xlu0 %v434, 37
    %v436 = vpop.permute.xlu0 %435
    %vm437 = vcmask 572712
    %s438 = scalar_lea.vmem %s1, 1
    %439 = vst.msk [vmem:[%s438] sm:$0x1] %vm437, %v436
    %s440 = scalar_lea.vmem [#allocation0], 36
    %v441 = vld [vmem:[%s440] sm:$0x1]
    %442 = vrot.lane.b32.xlu0 %v441, 36
    %v443 = vpop.permute.xlu0 %442
    %vm444 = vcmask 564512
    %s445 = scalar_lea.vmem %s1, 9
    %446 = vst.msk [vmem:[%s445] sm:$0x1] %vm444, %v443
    %s447 = scalar_lea.vmem [#allocation0], 1
    %v448 = vld [vmem:[%s447] sm:$0x1]
    %449 = vrot.lane.b32.xlu0 %v448, 33
    %v450 = vpop.permute.xlu0 %449
    %vm451 = vcmask 539912
    %452 = vst.msk [vmem:[%s1] sm:$0x1] %vm451, %v450
    %s453 = scalar_lea.vmem [#allocation0], 32
    %v454 = vld [vmem:[%s453] sm:$0x1]
    %455 = vrot.lane.b32.xlu0 %v454, 32
    %v456 = vpop.permute.xlu0 %455
    %vm457 = vcmask 531712
    %s458 = scalar_lea.vmem %s1, 8
    %459 = vst.msk [vmem:[%s458] sm:$0x1] %vm457, %v456
    %s460 = scalar_lea.vmem [#allocation0], 63
    %v461 = vld [vmem:[%s460] sm:$0x1]
    %462 = vrot.lane.b32.xlu0 %v461, 31
    %v463 = vpop.permute.xlu0 %462
    %vm464 = vcmask 523512
    %s465 = scalar_lea.vmem %s1, 16
    %466 = vst.msk [vmem:[%s465] sm:$0x1] %vm464, %v463
    %s467 = scalar_lea.vmem [#allocation0], 28
    %v468 = vld [vmem:[%s467] sm:$0x1]
    %469 = vrot.lane.b32.xlu0 %v468, 28
    %v470 = vpop.permute.xlu0 %469
    %vm471 = vcmask 498912
    %s472 = scalar_lea.vmem %s1, 7
    %473 = vst.msk [vmem:[%s472] sm:$0x1] %vm471, %v470
    %s474 = scalar_lea.vmem [#allocation0], 59
    %v475 = vld [vmem:[%s474] sm:$0x1]
    %476 = vrot.lane.b32.xlu0 %v475, 27
    %v477 = vpop.permute.xlu0 %476
    %vm478 = vcmask 490712
    %s479 = scalar_lea.vmem %s1, 15
    %480 = vst.msk [vmem:[%s479] sm:$0x1] %vm478, %v477
    %s481 = scalar_lea.vmem [#allocation0], 24
    %v482 = vld [vmem:[%s481] sm:$0x1]
    %483 = vrot.lane.b32.xlu0 %v482, 24
    %v484 = vpop.permute.xlu0 %483
    %vm485 = vcmask 466112
    %s486 = scalar_lea.vmem %s1, 6
    %487 = vst.msk [vmem:[%s486] sm:$0x1] %vm485, %v484
    %s488 = scalar_lea.vmem [#allocation0], 55
    %v489 = vld [vmem:[%s488] sm:$0x1]
    %490 = vrot.lane.b32.xlu0 %v489, 23
    %v491 = vpop.permute.xlu0 %490
    %vm492 = vcmask 457912
    %s493 = scalar_lea.vmem %s1, 14
    %494 = vst.msk [vmem:[%s493] sm:$0x1] %vm492, %v491
    %s495 = scalar_lea.vmem [#allocation0], 20
    %v496 = vld [vmem:[%s495] sm:$0x1]
    %497 = vrot.lane.b32.xlu0 %v496, 20
    %v498 = vpop.permute.xlu0 %497
    %vm499 = vcmask 433312
    %s500 = scalar_lea.vmem %s1, 5
    %501 = vst.msk [vmem:[%s500] sm:$0x1] %vm499, %v498
    %s502 = scalar_lea.vmem [#allocation0], 51
    %v503 = vld [vmem:[%s502] sm:$0x1]
    %504 = vrot.lane.b32.xlu0 %v503, 19
    %v505 = vpop.permute.xlu0 %504
    %vm506 = vcmask 425112
    %s507 = scalar_lea.vmem %s1, 13
    %508 = vst.msk [vmem:[%s507] sm:$0x1] %vm506, %v505
    %s509 = scalar_lea.vmem [#allocation0], 16
    %v510 = vld [vmem:[%s509] sm:$0x1]
    %511 = vrot.lane.b32.xlu0 %v510, 16
    %v512 = vpop.permute.xlu0 %511
    %vm513 = vcmask 400512
    %s514 = scalar_lea.vmem %s1, 4
    %515 = vst.msk [vmem:[%s514] sm:$0x1] %vm513, %v512
    %s516 = scalar_lea.vmem [#allocation0], 47
    %v517 = vld [vmem:[%s516] sm:$0x1]
    %518 = vrot.lane.b32.xlu0 %v517, 15
    %v519 = vpop.permute.xlu0 %518
    %vm520 = vcmask 392312
    %s521 = scalar_lea.vmem %s1, 12
    %522 = vst.msk [vmem:[%s521] sm:$0x1] %vm520, %v519
    %s523 = scalar_lea.vmem [#allocation0], 12
    %v524 = vld [vmem:[%s523] sm:$0x1]
    %525 = vrot.lane.b32.xlu0 %v524, 12
    %v526 = vpop.permute.xlu0 %525
    %vm527 = vcmask 367712
    %s528 = scalar_lea.vmem %s1, 3
    %529 = vst.msk [vmem:[%s528] sm:$0x1] %vm527, %v526
    %s530 = scalar_lea.vmem [#allocation0], 43
    %v531 = vld [vmem:[%s530] sm:$0x1]
    %532 = vrot.lane.b32.xlu0 %v531, 11
    %v533 = vpop.permute.xlu0 %532
    %vm534 = vcmask 359512
    %s535 = scalar_lea.vmem %s1, 11
    %536 = vst.msk [vmem:[%s535] sm:$0x1] %vm534, %v533
    %s537 = scalar_lea.vmem [#allocation0], 8
    %v538 = vld [vmem:[%s537] sm:$0x1]
    %539 = vrot.lane.b32.xlu0 %v538, 8
    %v540 = vpop.permute.xlu0 %539
    %vm541 = vcmask 334912
    %s542 = scalar_lea.vmem %s1, 2
    %543 = vst.msk [vmem:[%s542] sm:$0x1] %vm541, %v540
    %s544 = scalar_lea.vmem [#allocation0], 39
    %v545 = vld [vmem:[%s544] sm:$0x1]
    %546 = vrot.lane.b32.xlu0 %v545, 7
    %v547 = vpop.permute.xlu0 %546
    %vm548 = vcmask 326712
    %s549 = scalar_lea.vmem %s1, 10
    %550 = vst.msk [vmem:[%s549] sm:$0x1] %vm548, %v547
    %s551 = scalar_lea.vmem [#allocation0], 4
    %v552 = vld [vmem:[%s551] sm:$0x1]
    %553 = vrot.lane.b32.xlu0 %v552, 4
    %v554 = vpop.permute.xlu0 %553
    %vm555 = vcmask 302112
    %s556 = scalar_lea.vmem %s1, 1
    %557 = vst.msk [vmem:[%s556] sm:$0x1] %vm555, %v554
    %s558 = scalar_lea.vmem [#allocation0], 35
    %v559 = vld [vmem:[%s558] sm:$0x1]
    %560 = vrot.lane.b32.xlu0 %v559, 3
    %v561 = vpop.permute.xlu0 %560
    %vm562 = vcmask 293912
    %s563 = scalar_lea.vmem %s1, 9
    %564 = vst.msk [vmem:[%s563] sm:$0x1] %vm562, %v561
    %565 = vsyncpa [#allocation1], 1

// kernel: bce_log_loss.1
$region0: #{bce_log_loss.1}
  #allocation0 [shape = 'u32[]', space=smem, size = 0x4, offset = 0x4, fixed_abs, tag = 'smem constant byte address 0x4 - core index']
  #allocation1 [shape = 'u32[144,128]{1,0:T(1,128)}', space=vmem, size = 0x12000, scoped, tag = 'internal scratch']
  %s0 = inlined_call_operand.vmem [shape: f32[16,128], index: 0, kind: input, shape index: {}]
  %s1 = inlined_call_operand.vmem [shape: f32[16,128], index: 1, kind: input, shape index: {}]
  %s2 = inlined_call_operand.vmem [shape: f32[16,128], index: 2, kind: output, shape index: {}]
  %s3 = sld [smem:[#allocation0]]
  $region22: #{bce_log_loss.1} parent=0
    _
  %s5 = ssub.s32 1, %s3
  %s6 = scalar_select 0, %s5, %s3
  // Predicated region
  $region2: #{bce_log_loss.1} parent=0 // pred_check
    _
  $region3: #{bce_log_loss.1} parent=0 // pred_check_branch
    %8 = sbr.rel (0) target = $region5
  $region4: #{bce_log_loss.1} parent=0 // pred_region
    %s9 = sadd.s32 0, 0
    %s10 = smul.u32 2, %s9
    %p11 = scmp.lt.s32.totalorder %s10, 1
    %s12 = scalar_select %p11, %s10, 1
    %s13 = smul.addr %s12, 8
    %s14 = scalar_lea.vmem %s0, %s13
    %s15 = sadd.s32 0, 0
    %s16 = smul.u32 2, %s15
  $region5: #{bce_log_loss.1} parent=0 // pred_fallthru
    _
  // Predicated region
  $region6: #{bce_log_loss.1} parent=0 // pred_check
    _
  $region7: #{bce_log_loss.1} parent=0 // pred_check_branch
    %18 = sbr.rel (0) target = $region9
  $region8: #{bce_log_loss.1} parent=0 // pred_region
    %s19 = sadd.s32 0, 0
    %s20 = smul.u32 2, %s19
    %p21 = scmp.lt.s32.totalorder %s20, 1
    %s22 = scalar_select %p21, %s20, 1
    %s23 = smul.addr %s22, 8
    %s24 = scalar_lea.vmem %s1, %s23
    %s25 = sadd.s32 0, 0
    %s26 = smul.u32 2, %s25
  $region9: #{bce_log_loss.1} parent=0 // pred_fallthru
    _
  %s27 = sadd.s32 0, 0
  %s28 = smul.u32 2, %s27
  %p29 = scmp.lt.s32.totalorder %s28, 1
  %s30 = scalar_select %p29, %s28, 1
  %s31 = smul.addr %s30, 8
  %s32 = scalar_lea.vmem %s0, %s31
  %s33 = sadd.s32 0, 0
  %s34 = smul.u32 2, %s33
  %p35 = scmp.lt.s32.totalorder %s34, 1
  %s36 = scalar_select %p35, %s34, 1
  %s37 = smul.addr %s36, 8
  %s38 = scalar_lea.vmem %s1, %s37
  %s39 = sadd.s32 0, 0
  %s40 = smul.u32 2, %s39
  %p41 = scmp.lt.s32.totalorder %s40, 1
  %s42 = scalar_select %p41, %s40, 1
  %s43 = smul.addr %s42, 8
  %s44 = scalar_lea.vmem %s0, %s43
  %s45 = sadd.s32 0, 0
  %s46 = smul.u32 2, %s45
  %s47 = sadd.s32 0, 0
  %s48 = smul.u32 2, %s47
  %p49 = scmp.lt.s32.totalorder %s48, 1
  %s50 = scalar_select %p49, %s48, 1
  %s51 = smul.addr %s50, 8
  %s52 = scalar_lea.vmem %s1, %s51
  %s53 = sadd.s32 0, 0
  %s54 = smul.u32 2, %s53
  %p55 = scmp.eq.s32.totalorder 0, 0
  // Predicated region
  $region10: #{bce_log_loss.1} parent=0 // pred_check
    %p56 = pneg %p55
  $region11: #{bce_log_loss.1} parent=0 // pred_check_branch
    %58 = sbr.rel (%p56) target = $region13
  $region12: #{bce_log_loss.1} parent=0 // pred_region
    %59 = vst [vmem:[%s2] sm:$0xff] 0.0
    %60 = vst [vmem:[%s2 + $0x8] sm:$0xff] 0.0
  $region13: #{bce_log_loss.1} parent=0 // pred_fallthru
    _
  %v61 = vld [vmem:[%s44] sm:$0xff]
  %v62 = vld [vmem:[%s44 + $0x8] sm:$0xff]
  %v63 = vld [vmem:[%s52] sm:$0xff]
  %v64 = vld [vmem:[%s52 + $0x8] sm:$0xff]
  %v65 = vmax.f32 %v61, 0.0
  %v66 = vmax.f32 %v62, 0.0
  %v67 = vmul.f32 %v61, %v63
  %v68 = vmul.f32 %v62, %v64
  %v69 = vsub.f32 %v65, %v67
  %v70 = vsub.f32 %v66, %v68
  %v71 = vand.u32 2147483647, %v61
  %v72 = vand.u32 2147483647, %v62
  %v73 = vsub.f32 0.0, %v71
  %v74 = vsub.f32 0.0, %v72
  %v75 = vmul.f32 %v73, 1.442695
  %v76 = vpow.pop %v75
  %v77 = vmul.f32 %v74, 1.442695
  %v78 = vpow.pop %v77
  %v79 = vadd.f32 %v76, 1.0
  %v80 = vadd.f32 %v78, 1.0
  %v81 = vlog2.pop %v79
  %v82 = vmul.f32 %v81, 0.6931472
  %v83 = vlog2.pop %v80
  %v84 = vmul.f32 %v83, 0.6931472
  %v85 = vadd.f32 %v69, %v82
  %v86 = vadd.f32 %v70, %v84
  %v87 = vld [vmem:[%s2] sm:$0xff]
  %v88 = vld [vmem:[%s2 + $0x8] sm:$0xff]
  %v89 = vadd.f32 %v85, 0.0
  %v90 = vadd.f32 %v86, 0.0
  %v91 = vadd.f32 %v87, %v89
  %v92 = vadd.f32 %v88, %v90
  %93 = vst [vmem:[%s2] sm:$0xff] %v91
  %94 = vst [vmem:[%s2 + $0x8] sm:$0xff] %v92
  // Predicated region
  $region14: #{bce_log_loss.1} parent=0 // pred_check
    _
  $region15: #{bce_log_loss.1} parent=0 // pred_check_branch
    %96 = sbr.rel (0) target = $region17
  $region16: #{bce_log_loss.1} parent=0 // pred_region
    _
  $region17: #{bce_log_loss.1} parent=0 // pred_fallthru
    _
  // Predicated region
  $region18: #{bce_log_loss.1} parent=0 // pred_check
    _
  $region19: #{bce_log_loss.1} parent=0 // pred_check_branch
    %98 = sbr.rel (0) target = $region21
  $region20: #{bce_log_loss.1} parent=0 // pred_region
    _
  $region21: #{bce_log_loss.1} parent=0 // pred_fallthru
    _

</llo_original>
